<compile_context>
chip_gen: v7x
topology: tpu7x:2x2x1
jax: 0.10.0
libtpu: 0.0.40
codegen_flags: <defaults>
</compile_context>

<pallas_src>
import functools

import jax
import jax.numpy as jnp
from jax.experimental import pallas as pl
from jax.experimental.pallas import tpu as pltpu


def _mujoco_net_kernel(x_ref, w1_ref, b1_ref, w2_ref, b2_ref, w3_ref, b3_ref,
                       o_ref, *, tanh_dtype):
    # fc1 -> tanh   (x tile is (n_in, bm): contraction on sublanes, batch on lanes)
    h = jnp.dot(w1_ref[...], x_ref[...], preferred_element_type=jnp.float32)
    h = jnp.tanh((h + b1_ref[...]).astype(tanh_dtype))      # bias-add always in f32
    # fc2 -> tanh   (h stays f32 unless tanh_dtype=bf16 on v6e/v7x bf16 streaming)
    h = jnp.dot(w2_ref[...], h, preferred_element_type=jnp.float32)
    h = jnp.tanh((h + b2_ref[...]).astype(tanh_dtype))
    # fc3 (no activation)
    out = jnp.dot(w3_ref[...], h, preferred_element_type=jnp.float32) + b3_ref[...]
    o_ref[...] = out.astype(o_ref.dtype)                     # (n_out, bm) lane-dense store


def _tpu_generation():
    """Best-effort TPU generation from device_kind; None if unknown."""
    try:
        kind = jax.devices()[0].device_kind.lower()
    except Exception:
        return None
    for g in (7, 6, 5, 4):
        if f"v{g}" in kind or f"tpu{g}" in kind or f"tpu {g}" in kind:
            return g
    return None


def _tiling_defaults(gen):
    """(max batch tile, vmem_limit_bytes) per TPU generation.

    v7x has 64 MiB VMEM per TensorCore -> smaller cap + headroom; v4/v5e/v6e have
    128 MiB and a single TC -> bigger tiles further amortize per-step overhead.
    Unknown chips get the conservative (v7x-safe) settings.
    """
    if gen is not None and gen <= 6:
        return 65536, 96 * 1024 * 1024
    return 32768, 48 * 1024 * 1024


def _choose_bm(B, max_tile):
    """Batch tile on the lane axis: a multiple of 128 (or == B), capped at max_tile,
    with an even number of grid steps whenever B > 128 so v7x's two TensorCores
    stay balanced under dimension_semantics=('parallel',)."""
    if B <= 128:
        return B                      # single block (block dim == full array dim is legal)
    if B <= 256:
        return 128                    # two balanced steps
    steps = pl.cdiv(B, max_tile)
    if steps % 2 == 1:
        steps += 1                    # even step count (>= 2) for megacore balance
    bm = ((pl.cdiv(B, steps) + 127) // 128) * 128
    return max(128, min(bm, max_tile))


def mujoco_net_forward_t(xT, params, *, bm=None, stream_dtype=None, tanh_dtype=None):
    """Fused MujocoNet forward in the lane-dense (features, batch) layout.

    xT: (n_in, B) activations.  params: PyTorch-layout weights w{1,2,3} (out, in)
    and biases b{1,2,3} (out, 1), all f32.  Returns (n_out, B) in stream_dtype.

    stream_dtype (e.g. jnp.bfloat16) is the HBM-resident dtype of x / weights / output;
    MXU accumulation and bias-adds are always f32.  tanh is evaluated in bf16 only on
    v6e/v7x when streaming bf16 (2x EUP throughput); f32 everywhere else.
    """
    n_in, B = xT.shape
    h_size = params["w1"].shape[0]
    n_out = params["w3"].shape[0]

    if stream_dtype is None:
        stream_dtype = xT.dtype
    gen = _tpu_generation()
    max_tile, vmem_limit = _tiling_defaults(gen)
    if tanh_dtype is None:
        use_bf16_tanh = (stream_dtype == jnp.bfloat16) and (gen is None or gen >= 6)
        tanh_dtype = jnp.bfloat16 if use_bf16_tanh else jnp.float32
    if bm is None:
        bm = _choose_bm(B, max_tile)

    # Casts are no-ops when the caller already keeps x / weights in stream_dtype
    # (recommended for the bf16 path); weights are tiny either way.
    x_s = xT.astype(stream_dtype)
    w1 = params["w1"].astype(stream_dtype)
    w2 = params["w2"].astype(stream_dtype)
    w3 = params["w3"].astype(stream_dtype)
    b1, b2, b3 = params["b1"], params["b2"], params["b3"]    # tiny; keep f32

    grid = (pl.cdiv(B, bm),)

    def x_map(i):
        return (0, i)

    def rep_map(i):
        return (0, 0)

    # TODO(synk): the five weight/bias BlockSpecs could use pipeline_mode=pl.Buffered(1)
    # (constant index maps, never re-DMA'd) to shave a few KiB of VMEM; negligible at h=32.
    out_t = pl.pallas_call(
        functools.partial(_mujoco_net_kernel, tanh_dtype=tanh_dtype),
        out_shape=jax.ShapeDtypeStruct((n_out, B), stream_dtype),
        grid_spec=pltpu.PrefetchScalarGridSpec(
            num_scalar_prefetch=0,
            grid=grid,
            in_specs=[
                pl.BlockSpec((n_in, bm), x_map),         # x tile: batch on lanes
                pl.BlockSpec((h_size, n_in), rep_map),   # W1 (resident across the grid)
                pl.BlockSpec((h_size, 1), rep_map),      # b1 (column, lane-broadcast)
                pl.BlockSpec((h_size, h_size), rep_map), # W2
                pl.BlockSpec((h_size, 1), rep_map),      # b2
                pl.BlockSpec((n_out, h_size), rep_map),  # W3
                pl.BlockSpec((n_out, 1), rep_map),       # b3
            ],
            out_specs=pl.BlockSpec((n_out, bm), x_map),
        ),
        compiler_params=pltpu.CompilerParams(
            dimension_semantics=("parallel",),           # independent batch tiles -> megacore
            vmem_limit_bytes=vmem_limit,                 # generation-aware (see _tiling_defaults)
        ),
    )(x_s, w1, b1, w2, b2, w3, b3)
    return out_t


def mujoco_net_forward(x, params, **kwargs):
    """PyTorch-layout convenience wrapper: x (B, n_in) -> (B, n_out).

    NOTE: the two transposes here are standalone XLA HBM passes that roughly double
    memory traffic for this memory-bound net.  For best performance keep activations
    in the (features, batch) layout end-to-end and call mujoco_net_forward_t directly.
    """
    return mujoco_net_forward_t(x.T, params, **kwargs).T


def init_params(key, n_in, h_size, n_out):
    """Deterministic init mimicking nn.Linear's U(-1/sqrt(fan_in), 1/sqrt(fan_in)).

    Weights use PyTorch layout (out_features, in_features); biases are (out_features, 1).
    """
    ks = jax.random.split(key, 6)

    def linear(kw, kb, fan_in, fan_out):
        bound = 1.0 / float(jnp.sqrt(float(fan_in)))
        w = jax.random.uniform(kw, (fan_out, fan_in), jnp.float32, -bound, bound)
        b = jax.random.uniform(kb, (fan_out, 1), jnp.float32, -bound, bound)
        return w, b

    w1, b1 = linear(ks[0], ks[1], n_in, h_size)
    w2, b2 = linear(ks[2], ks[3], h_size, h_size)
    w3, b3 = linear(ks[4], ks[5], h_size, n_out)
    return dict(w1=w1, b1=b1, w2=w2, b2=b2, w3=w3, b3=b3)


def reference_forward(x, p):
    h = jnp.tanh(x @ p["w1"].T + p["b1"].T)
    h = jnp.tanh(h @ p["w2"].T + p["b2"].T)
    return h @ p["w3"].T + p["b3"].T


if __name__ == "__main__":
    key = jax.random.PRNGKey(0)
    k_x, k_p = jax.random.split(key)

    n_in, h_size, n_out = 16, 32, 4
    params = init_params(k_p, n_in, h_size, n_out)

    # 1) Small single-tile case (B=8, grid=(1,)) via the PyTorch-layout wrapper.
    x8 = jax.random.normal(k_x, (8, n_in), dtype=jnp.float32)
    out8 = jax.block_until_ready(mujoco_net_forward(x8, params))
    ref8 = reference_forward(x8, params)
    assert out8.shape == (8, n_out)
    assert jnp.allclose(out8, ref8, atol=1e-4, rtol=1e-4)

    # 2) Multi-tile case (B=300 -> bm=256, grid=(2,), ragged last tile) using the native
    #    lane-dense (features, batch) layout -> no wrapper transposes on the kernel path,
    #    and an even grid-step count for v7x's two TensorCores.
    x300 = jax.random.normal(jax.random.PRNGKey(1), (300, n_in), dtype=jnp.float32)
    out300_t = jax.block_until_ready(mujoco_net_forward_t(x300.T, params))
    ref300 = reference_forward(x300, params)
    assert out300_t.shape == (n_out, 300)
    assert jnp.allclose(out300_t.T, ref300, atol=1e-4, rtol=1e-4)

    # 3) bf16 streaming path: half the HBM bytes for x / weights / output, f32 MXU
    #    accumulation and bias-adds, bf16 tanh only on v6e/v7x (f32 tanh on v5e/v4).
    x512 = jax.random.normal(jax.random.PRNGKey(2), (512, n_in), dtype=jnp.float32)
    out512_t = jax.block_until_ready(
        mujoco_net_forward_t(x512.T, params, stream_dtype=jnp.bfloat16))
    ref512 = reference_forward(x512, params)
    assert out512_t.shape == (n_out, 512)
    assert jnp.allclose(out512_t.T.astype(jnp.float32), ref512, atol=5e-2, rtol=5e-2)

    print("KERNEL_OK")
</pallas_src>

<mosaic_0001>
module attributes {stable_mosaic.version = 11 : i64} {
  func.func @_mujoco_net_kernel(%arg0: i32, %arg1: memref<16x8xf32, #tpu.memory_space<vmem>>, %arg2: memref<32x16xf32, #tpu.memory_space<vmem>>, %arg3: memref<32x1xf32, #tpu.memory_space<vmem>>, %arg4: memref<32x32xf32, #tpu.memory_space<vmem>>, %arg5: memref<32x1xf32, #tpu.memory_space<vmem>>, %arg6: memref<4x32xf32, #tpu.memory_space<vmem>>, %arg7: memref<4x1xf32, #tpu.memory_space<vmem>>, %arg8: memref<4x8xf32, #tpu.memory_space<vmem>>) attributes {dimension_semantics = [#tpu.dimension_semantics<parallel>], iteration_bounds = array<i64: 1>, scalar_prefetch = 0 : i64, scratch_operands = 0 : i64, tpu.core_type = #tpu.core_type<tc>, window_params = [{transform_indices = @transform_0, window_bounds = array<i64: 16, 8>}, {pipeline_mode = #tpu.pipeline_mode<synchronous>, transform_indices = @transform_1, window_bounds = array<i64: 32, 16>}, {pipeline_mode = #tpu.pipeline_mode<synchronous>, transform_indices = @transform_2, window_bounds = array<i64: 32, 1>}, {pipeline_mode = #tpu.pipeline_mode<synchronous>, transform_indices = @transform_3, window_bounds = array<i64: 32, 32>}, {pipeline_mode = #tpu.pipeline_mode<synchronous>, transform_indices = @transform_4, window_bounds = array<i64: 32, 1>}, {pipeline_mode = #tpu.pipeline_mode<synchronous>, transform_indices = @transform_5, window_bounds = array<i64: 4, 32>}, {pipeline_mode = #tpu.pipeline_mode<synchronous>, transform_indices = @transform_6, window_bounds = array<i64: 4, 1>}, {transform_indices = @transform_7, window_bounds = array<i64: 4, 8>}]} {
    %c0 = arith.constant 0 : index
    %c0_0 = arith.constant 0 : index
    %0 = vector.load %arg2[%c0, %c0_0] : memref<32x16xf32, #tpu.memory_space<vmem>>, vector<32x16xf32>
    %c0_1 = arith.constant 0 : index
    %c0_2 = arith.constant 0 : index
    %1 = vector.load %arg1[%c0_1, %c0_2] : memref<16x8xf32, #tpu.memory_space<vmem>>, vector<16x8xf32>
    %cst = arith.constant dense<0.000000e+00> : vector<32x8xf32>
    %2 = tpu.matmul %0, %1, %cst {dimension_numbers = #tpu.dot_dimension_numbers<[1], [0], [0], [1], [0, 0, 1, 1], [], []>} : vector<32x16xf32>, vector<16x8xf32>, vector<32x8xf32> -> vector<32x8xf32>
    %c0_3 = arith.constant 0 : index
    %c0_4 = arith.constant 0 : index
    %3 = vector.load %arg3[%c0_3, %c0_4] : memref<32x1xf32, #tpu.memory_space<vmem>>, vector<32x1xf32>
    %4 = vector.broadcast %3 : vector<32x1xf32> to vector<32x8xf32>
    %5 = arith.addf %2, %4 : vector<32x8xf32>
    %6 = math.tanh %5 : vector<32x8xf32>
    %c0_5 = arith.constant 0 : index
    %c0_6 = arith.constant 0 : index
    %7 = vector.load %arg4[%c0_5, %c0_6] : memref<32x32xf32, #tpu.memory_space<vmem>>, vector<32x32xf32>
    %cst_7 = arith.constant dense<0.000000e+00> : vector<32x8xf32>
    %8 = tpu.matmul %7, %6, %cst_7 {dimension_numbers = #tpu.dot_dimension_numbers<[1], [0], [0], [1], [0, 0, 1, 1], [], []>} : vector<32x32xf32>, vector<32x8xf32>, vector<32x8xf32> -> vector<32x8xf32>
    %c0_8 = arith.constant 0 : index
    %c0_9 = arith.constant 0 : index
    %9 = vector.load %arg5[%c0_8, %c0_9] : memref<32x1xf32, #tpu.memory_space<vmem>>, vector<32x1xf32>
    %10 = vector.broadcast %9 : vector<32x1xf32> to vector<32x8xf32>
    %11 = arith.addf %8, %10 : vector<32x8xf32>
    %12 = math.tanh %11 : vector<32x8xf32>
    %c0_10 = arith.constant 0 : index
    %c0_11 = arith.constant 0 : index
    %13 = vector.load %arg6[%c0_10, %c0_11] : memref<4x32xf32, #tpu.memory_space<vmem>>, vector<4x32xf32>
    %cst_12 = arith.constant dense<0.000000e+00> : vector<4x8xf32>
    %14 = tpu.matmul %13, %12, %cst_12 {dimension_numbers = #tpu.dot_dimension_numbers<[1], [0], [0], [1], [0, 0, 1, 1], [], []>} : vector<4x32xf32>, vector<32x8xf32>, vector<4x8xf32> -> vector<4x8xf32>
    %c0_13 = arith.constant 0 : index
    %c0_14 = arith.constant 0 : index
    %15 = vector.load %arg7[%c0_13, %c0_14] : memref<4x1xf32, #tpu.memory_space<vmem>>, vector<4x1xf32>
    %16 = vector.broadcast %15 : vector<4x1xf32> to vector<4x8xf32>
    %17 = arith.addf %14, %16 : vector<4x8xf32>
    %c0_15 = arith.constant 0 : index
    %c0_16 = arith.constant 0 : index
    %18 = vector.load %arg8[%c0_15, %c0_16] : memref<4x8xf32, #tpu.memory_space<vmem>>, vector<4x8xf32>
    tpu.vector_store %arg8[%c0_15, %c0_16], %17 {strides = array<i32>} : memref<4x8xf32, #tpu.memory_space<vmem>>, vector<4x8xf32>,
    return
  }
  func.func @transform_0(%arg0: i32) -> (i32, i32) {
    %c0_i32 = arith.constant 0 : i32
    %c0_i32_0 = arith.constant 0 : i32
    return %c0_i32, %arg0 : i32, i32
  }
  func.func @transform_1(%arg0: i32) -> (i32, i32) {
    %c0_i32 = arith.constant 0 : i32
    %c0_i32_0 = arith.constant 0 : i32
    %c0_i32_1 = arith.constant 0 : i32
    return %c0_i32, %c0_i32_0 : i32, i32
  }
  func.func @transform_2(%arg0: i32) -> (i32, i32) {
    %c0_i32 = arith.constant 0 : i32
    %c0_i32_0 = arith.constant 0 : i32
    %c0_i32_1 = arith.constant 0 : i32
    return %c0_i32, %c0_i32_0 : i32, i32
  }
  func.func @transform_3(%arg0: i32) -> (i32, i32) {
    %c0_i32 = arith.constant 0 : i32
    %c0_i32_0 = arith.constant 0 : i32
    %c0_i32_1 = arith.constant 0 : i32
    return %c0_i32, %c0_i32_0 : i32, i32
  }
  func.func @transform_4(%arg0: i32) -> (i32, i32) {
    %c0_i32 = arith.constant 0 : i32
    %c0_i32_0 = arith.constant 0 : i32
    %c0_i32_1 = arith.constant 0 : i32
    return %c0_i32, %c0_i32_0 : i32, i32
  }
  func.func @transform_5(%arg0: i32) -> (i32, i32) {
    %c0_i32 = arith.constant 0 : i32
    %c0_i32_0 = arith.constant 0 : i32
    %c0_i32_1 = arith.constant 0 : i32
    return %c0_i32, %c0_i32_0 : i32, i32
  }
  func.func @transform_6(%arg0: i32) -> (i32, i32) {
    %c0_i32 = arith.constant 0 : i32
    %c0_i32_0 = arith.constant 0 : i32
    %c0_i32_1 = arith.constant 0 : i32
    return %c0_i32, %c0_i32_0 : i32, i32
  }
  func.func @transform_7(%arg0: i32) -> (i32, i32) {
    %c0_i32 = arith.constant 0 : i32
    %c0_i32_0 = arith.constant 0 : i32
    return %c0_i32, %arg0 : i32, i32
  }
}

</mosaic_0001>

<llo_original>
// kernel: tpu_custom_call.1
$region0: #{tpu_custom_call.1}
  #allocation0 [shape = 'u32[]', space=smem, size = 0x4, offset = 0x4, fixed_abs, tag = 'smem constant byte address 0x4 - core index']
  #allocation1 [shape = 'u32[144,128]{1,0:T(1,128)}', space=vmem, size = 0x12000, scoped, tag = 'internal scratch']
  %s0 = inlined_call_operand.vmem [shape: f32[16,8], index: 0, kind: input, shape index: {}]
  %s1 = inlined_call_operand.vmem [shape: f32[32,16], index: 1, kind: input, shape index: {}]
  %s2 = inlined_call_operand.vmem [shape: f32[32,1], index: 2, kind: input, shape index: {}]
  %s3 = inlined_call_operand.vmem [shape: f32[32,32], index: 3, kind: input, shape index: {}]
  %s4 = inlined_call_operand.vmem [shape: f32[32,1], index: 4, kind: input, shape index: {}]
  %s5 = inlined_call_operand.vmem [shape: f32[4,32], index: 5, kind: input, shape index: {}]
  %s6 = inlined_call_operand.vmem [shape: f32[4,1], index: 6, kind: input, shape index: {}]
  %s7 = inlined_call_operand.hbm [shape: f32[4,8], index: 7, kind: output, shape index: {}]
  %s8 = sld [smem:[#allocation0]]
  $region38: #{tpu_custom_call.1} parent=0
    _
  %s10 = ssub.s32 1, %s8
  %s11 = scalar_select 0, %s10, %s8
  $region1: #{tpu_custom_call.1} parent=0
    #allocation2 [shape = 'u8[2048]{0}', space=vmem, size = 0x800, scoped, tag = 'output window, operand 0, single buffered']
    #allocation3 [shape = 's32[1]{0}', space=sflag, size = 0x4, scoped, tag = 'scoped memory for tpu_custom_call.1']
    %12 = vsyncpa [#allocation3], 0
    // Predicated region
    $region2: #{tpu_custom_call.1} parent=1 // pred_check
      _
    $region3: #{tpu_custom_call.1} parent=1 // pred_check_branch
      %14 = sbr.rel (0) target = $region5
    $region4: #{tpu_custom_call.1} parent=1 // pred_region
      _
    $region5: #{tpu_custom_call.1} parent=1 // pred_fallthru
      _
    // Predicated region
    $region6: #{tpu_custom_call.1} parent=1 // pred_check
      _
    $region7: #{tpu_custom_call.1} parent=1 // pred_check_branch
      %16 = sbr.rel (0) target = $region9
    $region8: #{tpu_custom_call.1} parent=1 // pred_region
      _
    $region9: #{tpu_custom_call.1} parent=1 // pred_fallthru
      _
    // Predicated region
    $region10: #{tpu_custom_call.1} parent=1 // pred_check
      _
    $region11: #{tpu_custom_call.1} parent=1 // pred_check_branch
      %18 = sbr.rel (0) target = $region13
    $region12: #{tpu_custom_call.1} parent=1 // pred_region
      _
    $region13: #{tpu_custom_call.1} parent=1 // pred_fallthru
      _
    // Predicated region
    $region14: #{tpu_custom_call.1} parent=1 // pred_check
      _
    $region15: #{tpu_custom_call.1} parent=1 // pred_check_branch
      %20 = sbr.rel (0) target = $region17
    $region16: #{tpu_custom_call.1} parent=1 // pred_region
      _
    $region17: #{tpu_custom_call.1} parent=1 // pred_fallthru
      _
    // Predicated region
    $region18: #{tpu_custom_call.1} parent=1 // pred_check
      _
    $region19: #{tpu_custom_call.1} parent=1 // pred_check_branch
      %22 = sbr.rel (0) target = $region21
    $region20: #{tpu_custom_call.1} parent=1 // pred_region
      _
    $region21: #{tpu_custom_call.1} parent=1 // pred_fallthru
      _
    // Predicated region
    $region22: #{tpu_custom_call.1} parent=1 // pred_check
      _
    $region23: #{tpu_custom_call.1} parent=1 // pred_check_branch
      %24 = sbr.rel (0) target = $region25
    $region24: #{tpu_custom_call.1} parent=1 // pred_region
      _
    $region25: #{tpu_custom_call.1} parent=1 // pred_fallthru
      _
    // Predicated region
    $region26: #{tpu_custom_call.1} parent=1 // pred_check
      _
    $region27: #{tpu_custom_call.1} parent=1 // pred_check_branch
      %26 = sbr.rel (0) target = $region29
    $region28: #{tpu_custom_call.1} parent=1 // pred_region
      _
    $region29: #{tpu_custom_call.1} parent=1 // pred_fallthru
      _
    %v27 = vld [vmem:[%s1] sm:$0xff]
    %v28 = vld [vmem:[%s1 + $0x8] sm:$0xff]
    %v29 = vld [vmem:[%s1 + $0x10] sm:$0xff]
    %v30 = vld [vmem:[%s1 + $0x18] sm:$0xff]
    %v31 = vld [vmem:[%s0] sm:$0xff]
    %v32 = vld [vmem:[%s0 + $0x8] sm:$0xff]
    %v33 = vld [vmem:[%s2] sm:$0xff]
    %v34 = vld [vmem:[%s2 + $0x8] sm:$0xff]
    %v35 = vld [vmem:[%s2 + $0x10] sm:$0xff]
    %v36 = vld [vmem:[%s2 + $0x18] sm:$0xff]
    %38 = vset.pattern.permute.xlu0 0
    %39 = vperm.xlu0 %38, %v33
    %v40 = vpop.permute.xlu0 %39
    %43 = vset.pattern.permute.xlu0 0
    %44 = vperm.xlu0 %43, %v34
    %v45 = vpop.permute.xlu0 %44
    %48 = vset.pattern.permute.xlu0 0
    %49 = vperm.xlu0 %48, %v35
    %v50 = vpop.permute.xlu0 %49
    %53 = vset.pattern.permute.xlu0 0
    %54 = vperm.xlu0 %53, %v36
    %v55 = vpop.permute.xlu0 %54
    %vm57 = vcmask 130048
    %v59 = vsel %vm57, %v27, 0
    %v62 = vsel %vm57, %v28, 0
    %v65 = vsel %vm57, %v29, 0
    %v68 = vsel %vm57, %v30, 0
    %70 = vmatprep.subr.mxu0 0.0
    %71 = vmatpush1.msra.mxu0 %v31
    %72 = vmatprep.subr.mxu0 0.0
    %73 = vmatpush1.msra.mxu0 %v32
    %74 = vmatprep.subr.mxu0 0.0
    %75 = vmatpush1.msra.mxu0 0.0
    %76 = vmatprep.subr.mxu0 0.0
    %77 = vmatpush1.msra.mxu0 0.0
    %78 = vmatprep.subr.mxu0 0.0
    %79 = vmatpush1.msra.mxu0 0.0
    %80 = vmatprep.subr.mxu0 0.0
    %81 = vmatpush1.msra.mxu0 0.0
    %82 = vmatprep.subr.mxu0 0.0
    %83 = vmatpush1.msra.mxu0 0.0
    %84 = vmatprep.subr.mxu0 0.0
    %85 = vmatpush1.msra.mxu0 0.0
    %86 = vmatprep.subr.mxu0 0.0
    %87 = vmatpush1.msra.mxu0 0.0
    %88 = vmatprep.subr.mxu0 0.0
    %89 = vmatpush1.msra.mxu0 0.0
    %90 = vmatprep.subr.mxu0 0.0
    %91 = vmatpush1.msra.mxu0 0.0
    %92 = vmatprep.subr.mxu0 0.0
    %93 = vmatpush1.msra.mxu0 0.0
    %94 = vmatprep.subr.mxu0 0.0
    %95 = vmatpush1.msra.mxu0 0.0
    %96 = vmatprep.subr.mxu0 0.0
    %97 = vmatpush1.msra.mxu0 0.0
    %98 = vmatprep.subr.mxu0 0.0
    %99 = vmatpush1.msra.mxu0 0.0
    %100 = vmatprep.subr.mxu0 0.0
    %101 = vmatpush1.msra.mxu0 0.0
    %102 = vmatprep.subr.mxu0 0.0
    %103 = vmatpush1.msra.mxu0 0.0
    %104 = vmatprep.subr.mxu0 0.0
    %105 = vmatpush1.msra.mxu0 0.0
    %106 = vmatprep.subr.mxu0 0.0
    %107 = vmatpush1.msra.mxu0 0.0
    %108 = vmatprep.subr.mxu0 0.0
    %109 = vmatpush1.msra.mxu0 0.0
    %110 = vmatprep.subr.mxu0 0.0
    %111 = vmatpush1.msra.mxu0 0.0
    %112 = vmatprep.subr.mxu0 0.0
    %113 = vmatpush1.msra.mxu0 0.0
    %114 = vmatprep.subr.mxu0 0.0
    %115 = vmatpush1.msra.mxu0 0.0
    %116 = vmatprep.subr.mxu0 0.0
    %117 = vmatpush1.msra.mxu0 0.0
    %118 = vmatprep.subr.mxu0 0.0
    %119 = vmatpush1.msra.mxu0 0.0
    %120 = vmatprep.subr.mxu0 0.0
    %121 = vmatpush1.msra.mxu0 0.0
    %122 = vmatprep.subr.mxu0 0.0
    %123 = vmatpush1.msra.mxu0 0.0
    %124 = vmatprep.subr.mxu0 0.0
    %125 = vmatpush1.msra.mxu0 0.0
    %126 = vmatprep.subr.mxu0 0.0
    %127 = vmatpush1.msra.mxu0 0.0
    %128 = vmatprep.subr.mxu0 0.0
    %129 = vmatpush1.msra.mxu0 0.0
    %130 = vmatprep.subr.mxu0 0.0
    %131 = vmatpush1.msra.mxu0 0.0
    %132 = vmatprep.subr.mxu0 0.0
    %133 = vmatpush1.msra.mxu0 0.0
    %134 = vmatprep.mubr.f32.mxu0 0.0
    %135 = vmatmul.mubr.f32.gmra.mrb[0].mxu0 %v59
    %v136 = vpop.f32.mrb[0].mxu0
    %v137 = vadd.f32 %v40, %v136
    %v138 = vpop.f32.mrb[0].mxu0
    %139 = vmatprep.mubr.f32.mxu0 0.0
    %140 = vmatmul.mubr.f32.gmra.mrb[0].mxu0 %v62
    %v141 = vpop.f32.mrb[0].mxu0
    %v142 = vadd.f32 %v45, %v141
    %v143 = vpop.f32.mrb[0].mxu0
    %144 = vmatprep.mubr.f32.mxu0 0.0
    %145 = vmatmul.mubr.f32.gmra.mrb[0].mxu0 %v65
    %v146 = vpop.f32.mrb[0].mxu0
    %v147 = vadd.f32 %v50, %v146
    %v148 = vpop.f32.mrb[0].mxu0
    %149 = vmatprep.mubr.f32.mxu0 0.0
    %150 = vmatmul.mubr.f32.gmra.mrb[0].mxu0 %v68
    %v151 = vpop.f32.mrb[0].mxu0
    %v152 = vadd.f32 %v55, %v151
    %v153 = vpop.f32.mrb[0].mxu0
    %154 = vdwg.mxu0
    %v155 = vtanh.pop %v137
    %v156 = vtanh.pop %v142
    %v157 = vtanh.pop %v147
    %v158 = vtanh.pop %v152
    %v159 = vld [vmem:[%s3] sm:$0xff]
    %v160 = vld [vmem:[%s3 + $0x8] sm:$0xff]
    %v161 = vld [vmem:[%s3 + $0x10] sm:$0xff]
    %v162 = vld [vmem:[%s3 + $0x18] sm:$0xff]
    %v163 = vld [vmem:[%s4] sm:$0xff]
    %v164 = vld [vmem:[%s4 + $0x8] sm:$0xff]
    %v165 = vld [vmem:[%s4 + $0x10] sm:$0xff]
    %v166 = vld [vmem:[%s4 + $0x18] sm:$0xff]
    %168 = vset.pattern.permute.xlu0 0
    %169 = vperm.xlu0 %168, %v163
    %v170 = vpop.permute.xlu0 %169
    %173 = vset.pattern.permute.xlu0 0
    %174 = vperm.xlu0 %173, %v164
    %v175 = vpop.permute.xlu0 %174
    %178 = vset.pattern.permute.xlu0 0
    %179 = vperm.xlu0 %178, %v165
    %v180 = vpop.permute.xlu0 %179
    %183 = vset.pattern.permute.xlu0 0
    %184 = vperm.xlu0 %183, %v166
    %v185 = vpop.permute.xlu0 %184
    %vm187 = vcmask 261120
    %v189 = vsel %vm187, %v159, 0
    %v192 = vsel %vm187, %v160, 0
    %v195 = vsel %vm187, %v161, 0
    %v198 = vsel %vm187, %v162, 0
    %200 = vmatprep.subr.mxu0 0.0
    %201 = vmatpush1.msra.mxu0 %v155
    %202 = vmatprep.subr.mxu0 0.0
    %203 = vmatpush1.msra.mxu0 %v156
    %204 = vmatprep.subr.mxu0 0.0
    %205 = vmatpush1.msra.mxu0 %v157
    %206 = vmatprep.subr.mxu0 0.0
    %207 = vmatpush1.msra.mxu0 %v158
    %208 = vmatprep.subr.mxu0 0.0
    %209 = vmatpush1.msra.mxu0 0.0
    %210 = vmatprep.subr.mxu0 0.0
    %211 = vmatpush1.msra.mxu0 0.0
    %212 = vmatprep.subr.mxu0 0.0
    %213 = vmatpush1.msra.mxu0 0.0
    %214 = vmatprep.subr.mxu0 0.0
    %215 = vmatpush1.msra.mxu0 0.0
    %216 = vmatprep.subr.mxu0 0.0
    %217 = vmatpush1.msra.mxu0 0.0
    %218 = vmatprep.subr.mxu0 0.0
    %219 = vmatpush1.msra.mxu0 0.0
    %220 = vmatprep.subr.mxu0 0.0
    %221 = vmatpush1.msra.mxu0 0.0
    %222 = vmatprep.subr.mxu0 0.0
    %223 = vmatpush1.msra.mxu0 0.0
    %224 = vmatprep.subr.mxu0 0.0
    %225 = vmatpush1.msra.mxu0 0.0
    %226 = vmatprep.subr.mxu0 0.0
    %227 = vmatpush1.msra.mxu0 0.0
    %228 = vmatprep.subr.mxu0 0.0
    %229 = vmatpush1.msra.mxu0 0.0
    %230 = vmatprep.subr.mxu0 0.0
    %231 = vmatpush1.msra.mxu0 0.0
    %232 = vmatprep.subr.mxu0 0.0
    %233 = vmatpush1.msra.mxu0 0.0
    %234 = vmatprep.subr.mxu0 0.0
    %235 = vmatpush1.msra.mxu0 0.0
    %236 = vmatprep.subr.mxu0 0.0
    %237 = vmatpush1.msra.mxu0 0.0
    %238 = vmatprep.subr.mxu0 0.0
    %239 = vmatpush1.msra.mxu0 0.0
    %240 = vmatprep.subr.mxu0 0.0
    %241 = vmatpush1.msra.mxu0 0.0
    %242 = vmatprep.subr.mxu0 0.0
    %243 = vmatpush1.msra.mxu0 0.0
    %244 = vmatprep.subr.mxu0 0.0
    %245 = vmatpush1.msra.mxu0 0.0
    %246 = vmatprep.subr.mxu0 0.0
    %247 = vmatpush1.msra.mxu0 0.0
    %248 = vmatprep.subr.mxu0 0.0
    %249 = vmatpush1.msra.mxu0 0.0
    %250 = vmatprep.subr.mxu0 0.0
    %251 = vmatpush1.msra.mxu0 0.0
    %252 = vmatprep.subr.mxu0 0.0
    %253 = vmatpush1.msra.mxu0 0.0
    %254 = vmatprep.subr.mxu0 0.0
    %255 = vmatpush1.msra.mxu0 0.0
    %256 = vmatprep.subr.mxu0 0.0
    %257 = vmatpush1.msra.mxu0 0.0
    %258 = vmatprep.subr.mxu0 0.0
    %259 = vmatpush1.msra.mxu0 0.0
    %260 = vmatprep.subr.mxu0 0.0
    %261 = vmatpush1.msra.mxu0 0.0
    %262 = vmatprep.subr.mxu0 0.0
    %263 = vmatpush1.msra.mxu0 0.0
    %264 = vmatprep.mubr.f32.mxu0 0.0
    %265 = vmatmul.mubr.f32.gmra.mrb[0].mxu0 %v189
    %v266 = vpop.f32.mrb[0].mxu0
    %v267 = vadd.f32 %v170, %v266
    %v268 = vpop.f32.mrb[0].mxu0
    %269 = vmatprep.mubr.f32.mxu0 0.0
    %270 = vmatmul.mubr.f32.gmra.mrb[0].mxu0 %v192
    %v271 = vpop.f32.mrb[0].mxu0
    %v272 = vadd.f32 %v175, %v271
    %v273 = vpop.f32.mrb[0].mxu0
    %274 = vmatprep.mubr.f32.mxu0 0.0
    %275 = vmatmul.mubr.f32.gmra.mrb[0].mxu0 %v195
    %v276 = vpop.f32.mrb[0].mxu0
    %v277 = vadd.f32 %v180, %v276
    %v278 = vpop.f32.mrb[0].mxu0
    %279 = vmatprep.mubr.f32.mxu0 0.0
    %280 = vmatmul.mubr.f32.gmra.mrb[0].mxu0 %v198
    %v281 = vpop.f32.mrb[0].mxu0
    %v282 = vadd.f32 %v185, %v281
    %v283 = vpop.f32.mrb[0].mxu0
    %284 = vdwg.mxu0
    %v285 = vtanh.pop %v267
    %v286 = vtanh.pop %v272
    %v287 = vtanh.pop %v277
    %v288 = vtanh.pop %v282
    %v289 = vld [vmem:[%s5] sm:$0xf]
    %v290 = vld [vmem:[%s6] sm:$0xf]
    %292 = vset.pattern.permute.xlu0 0
    %293 = vperm.xlu0 %292, %v290
    %v294 = vpop.permute.xlu0 %293
    %v297 = vsel %vm187, %v289, 0
    %299 = vmatprep.subr.mxu0 0.0
    %300 = vmatpush1.msra.mxu0 %v285
    %301 = vmatprep.subr.mxu0 0.0
    %302 = vmatpush1.msra.mxu0 %v286
    %303 = vmatprep.subr.mxu0 0.0
    %304 = vmatpush1.msra.mxu0 %v287
    %305 = vmatprep.subr.mxu0 0.0
    %306 = vmatpush1.msra.mxu0 %v288
    %307 = vmatprep.subr.mxu0 0.0
    %308 = vmatpush1.msra.mxu0 0.0
    %309 = vmatprep.subr.mxu0 0.0
    %310 = vmatpush1.msra.mxu0 0.0
    %311 = vmatprep.subr.mxu0 0.0
    %312 = vmatpush1.msra.mxu0 0.0
    %313 = vmatprep.subr.mxu0 0.0
    %314 = vmatpush1.msra.mxu0 0.0
    %315 = vmatprep.subr.mxu0 0.0
    %316 = vmatpush1.msra.mxu0 0.0
    %317 = vmatprep.subr.mxu0 0.0
    %318 = vmatpush1.msra.mxu0 0.0
    %319 = vmatprep.subr.mxu0 0.0
    %320 = vmatpush1.msra.mxu0 0.0
    %321 = vmatprep.subr.mxu0 0.0
    %322 = vmatpush1.msra.mxu0 0.0
    %323 = vmatprep.subr.mxu0 0.0
    %324 = vmatpush1.msra.mxu0 0.0
    %325 = vmatprep.subr.mxu0 0.0
    %326 = vmatpush1.msra.mxu0 0.0
    %327 = vmatprep.subr.mxu0 0.0
    %328 = vmatpush1.msra.mxu0 0.0
    %329 = vmatprep.subr.mxu0 0.0
    %330 = vmatpush1.msra.mxu0 0.0
    %331 = vmatprep.subr.mxu0 0.0
    %332 = vmatpush1.msra.mxu0 0.0
    %333 = vmatprep.subr.mxu0 0.0
    %334 = vmatpush1.msra.mxu0 0.0
    %335 = vmatprep.subr.mxu0 0.0
    %336 = vmatpush1.msra.mxu0 0.0
    %337 = vmatprep.subr.mxu0 0.0
    %338 = vmatpush1.msra.mxu0 0.0
    %339 = vmatprep.subr.mxu0 0.0
    %340 = vmatpush1.msra.mxu0 0.0
    %341 = vmatprep.subr.mxu0 0.0
    %342 = vmatpush1.msra.mxu0 0.0
    %343 = vmatprep.subr.mxu0 0.0
    %344 = vmatpush1.msra.mxu0 0.0
    %345 = vmatprep.subr.mxu0 0.0
    %346 = vmatpush1.msra.mxu0 0.0
    %347 = vmatprep.subr.mxu0 0.0
    %348 = vmatpush1.msra.mxu0 0.0
    %349 = vmatprep.subr.mxu0 0.0
    %350 = vmatpush1.msra.mxu0 0.0
    %351 = vmatprep.subr.mxu0 0.0
    %352 = vmatpush1.msra.mxu0 0.0
    %353 = vmatprep.subr.mxu0 0.0
    %354 = vmatpush1.msra.mxu0 0.0
    %355 = vmatprep.subr.mxu0 0.0
    %356 = vmatpush1.msra.mxu0 0.0
    %357 = vmatprep.subr.mxu0 0.0
    %358 = vmatpush1.msra.mxu0 0.0
    %359 = vmatprep.subr.mxu0 0.0
    %360 = vmatpush1.msra.mxu0 0.0
    %361 = vmatprep.subr.mxu0 0.0
    %362 = vmatpush1.msra.mxu0 0.0
    %363 = vmatprep.mubr.f32.mxu0 0.0
    %364 = vmatmul.mubr.f32.gmra.mrb[0].mxu0 %v297
    %v365 = vpop.f32.mrb[0].mxu0
    %v366 = vadd.f32 %v294, %v365
    %v367 = vpop.f32.mrb[0].mxu0
    %368 = vdwg.mxu0
    %vm369 = vcmask 60416
    %370 = vst.msk [vmem:[#allocation2] sm:$0xf] %vm369, %v366
    // Predicated region
    $region30: #{tpu_custom_call.1} parent=1 // pred_check
      _
    $region31: #{tpu_custom_call.1} parent=1 // pred_check_branch
      %372 = sbr.rel (0) target = $region33
    $region32: #{tpu_custom_call.1} parent=1 // pred_region
      %s374 = ssub.s32 64, 64
      %375 = vsyncadd [#allocation3], %s374
      %s377 = sshll.u32 [#allocation2], 4
      %s378 = int_to_ptr.vmem [resolvable:$true] %s377
      %380 = dma.vmem_to_hbm [thread:$0]  %s378, 64, %s7, [#allocation3]
    $region33: #{tpu_custom_call.1} parent=1 // pred_fallthru
      _
    // Predicated region
    $region34: #{tpu_custom_call.1} parent=1 // pred_check
      _
    $region35: #{tpu_custom_call.1} parent=1 // pred_check_branch
      %382 = sbr.rel (0) target = $region37
    $region36: #{tpu_custom_call.1} parent=1 // pred_region
      %383 = dma.done [#allocation3], 64
    $region37: #{tpu_custom_call.1} parent=1 // pred_fallthru
      _
    %384 = vsyncpa [#allocation3], 1

</llo_original>
